<compile_context>
chip_gen: v7x
topology: tpu7x:2x2x1
jax: 0.10.0
libtpu: 0.0.40
codegen_flags: <defaults>
</compile_context>

<pallas_src>
import jax
import jax.numpy as jnp
import numpy as np
from jax.experimental import pallas as pl
from jax.experimental.pallas import tpu as pltpu


# ----------------------------------------------------------------------------
# Kernel: pure pass-through (the only "compute" a no-op module admits).
# ----------------------------------------------------------------------------
def _identity_kernel(x_ref, o_ref):
    o_ref[...] = x_ref[...]


_SMALL_BYTES = 4 << 20  # below this, keep the whole slab VMEM-resident (no grid)


def _copy_small(x2d):
    """Whole-array VMEM-resident identity copy (no grid, no pipeline)."""
    return pl.pallas_call(
        _identity_kernel,
        out_shape=jax.ShapeDtypeStruct(x2d.shape, x2d.dtype),
        in_specs=[pl.BlockSpec(memory_space=pltpu.MemorySpace.VMEM)],
        out_specs=pl.BlockSpec(memory_space=pltpu.MemorySpace.VMEM),
        input_output_aliases={0: 0},  # output aliases the input buffer
    )(x2d)


def _copy_gridded(x2d):
    """1-D grid over rows, full-width column blocks, for large slabs."""
    rows, cols = x2d.shape
    block_rows = min(rows, 1024)  # >=512-row tiles reach ~85% of HBM roofline
    tile_bytes = block_rows * cols * x2d.dtype.itemsize
    # in (3 bufs) + out (2 bufs) + headroom, capped well under v7x's 64 MiB.
    vmem_budget = min(6 * tile_bytes + (1 << 20), 48 << 20)
    return pl.pallas_call(
        _identity_kernel,
        out_shape=jax.ShapeDtypeStruct((rows, cols), x2d.dtype),
        grid=(pl.cdiv(rows, block_rows),),
        in_specs=[pl.BlockSpec((block_rows, cols), lambda i: (i, 0),
                               pipeline_mode=pl.Buffered(3))],
        out_specs=pl.BlockSpec((block_rows, cols), lambda i: (i, 0)),
        input_output_aliases={0: 0},
        compiler_params=pltpu.CompilerParams(
            dimension_semantics=("parallel",),   # shard rows across v7x's 2 TCs
            vmem_limit_bytes=vmem_budget,
        ),
    )(x2d)


# jit wrappers; donate arg 0 so the input/output aliasing is actually honored
# (no fresh output HBM allocation, no extra copy to preserve the input).
_copy_small_jit = jax.jit(_copy_small, donate_argnums=(0,))
_copy_gridded_jit = jax.jit(_copy_gridded, donate_argnums=(0,))


def _identity_copy(x2d):
    nbytes = x2d.size * x2d.dtype.itemsize
    if nbytes <= _SMALL_BYTES:
        return _copy_small_jit(x2d)
    return _copy_gridded_jit(x2d)


def _to_lane_dense_2d(x):
    """Flatten, zero-pad to a multiple of 8*128, reshape to (rows, 128).

    Keeps the last dim == 128 lanes (unmasked full-width stores) and the row
    count a multiple of 8 (aligned f32 (8,128) tiles).
    """
    flat = x.reshape(-1)
    n = flat.shape[0]
    pad_to = 8 * 128
    padded = ((n + pad_to - 1) // pad_to) * pad_to
    if padded != n:
        flat = jnp.pad(flat, (0, padded - n))
    return flat.reshape(padded // 128, 128), n


# ----------------------------------------------------------------------------
# Faithful forward: LogBart.forward ignores `inputs` and returns None.
# ----------------------------------------------------------------------------
def log_bart_forward(inputs):
    # TODO(synk): LogBart.forward returns None unconditionally; there is no
    # computation to translate into a Pallas kernel, so the forward path
    # performs zero work and never invokes pallas_call.
    del inputs
    return None


if __name__ == "__main__":
    key = jax.random.PRNGKey(0)
    # Small NCHW-style input consistent with a conv/seq2seq style module.
    B, C, H, W = 2, 4, 16, 16
    x = jax.random.normal(key, (B, C, H, W), dtype=jnp.float32)

    # Faithful forward semantics: no pallas_call, returns None.
    out = log_bart_forward(x)
    assert out is None

    # --- Test-only Pallas exercise (never on the forward / production path) ---
    x2d, orig_len = _to_lane_dense_2d(x)          # (16, 128) f32, 8 KiB
    expected = np.asarray(jax.device_get(x2d))    # host copy BEFORE donation
    y2d = _identity_copy(x2d)                     # aliased identity copy
    jax.block_until_ready(y2d)

    assert y2d.shape == expected.shape
    np.testing.assert_allclose(np.asarray(y2d), expected)
    # Original (unpadded) data survives the round trip exactly.
    np.testing.assert_allclose(
        np.asarray(y2d).reshape(-1)[:orig_len],
        np.asarray(jax.device_get(x)).reshape(-1),
    )

    print("KERNEL_OK")
</pallas_src>

<mosaic_0001>
module attributes {stable_mosaic.version = 11 : i64} {
  func.func @_identity_kernel(%arg0: memref<16x128xf32, #tpu.memory_space<vmem>>, %arg1: memref<16x128xf32, #tpu.memory_space<vmem>>) attributes {dimension_semantics = [], scalar_prefetch = 0 : i64, scratch_operands = 0 : i64, tpu.core_type = #tpu.core_type<tc>} {
    %c0 = arith.constant 0 : index
    %c0_0 = arith.constant 0 : index
    %0 = vector.load %arg0[%c0, %c0_0] : memref<16x128xf32, #tpu.memory_space<vmem>>, vector<16x128xf32>
    %c0_1 = arith.constant 0 : index
    %c0_2 = arith.constant 0 : index
    %1 = vector.load %arg1[%c0_1, %c0_2] : memref<16x128xf32, #tpu.memory_space<vmem>>, vector<16x128xf32>
    tpu.vector_store %arg1[%c0_1, %c0_2], %0 {strides = array<i32>} : memref<16x128xf32, #tpu.memory_space<vmem>>, vector<16x128xf32>,
    return
  }
}

</mosaic_0001>

<llo_original>
// kernel: _copy_small.1
$region0: #{_copy_small.1}
  #allocation0 [shape = 'u32[]', space=smem, size = 0x4, offset = 0x4, fixed_abs, tag = 'smem constant byte address 0x4 - core index']
  #allocation1 [shape = 'u32[144,128]{1,0:T(1,128)}', space=vmem, size = 0x12000, scoped, tag = 'internal scratch']
  %s0 = inlined_call_operand.hbm [shape: f32[16,128], index: 0, kind: input, shape index: {}, may-alias: {0,1}]
  %s1 = inlined_call_operand.hbm [shape: f32[16,128], index: 1, kind: output, shape index: {}, may-alias: {0,1}]
  %s2 = sld [smem:[#allocation0]]
  $region18: #{_copy_small.1} parent=0
    _
  %s4 = ssub.s32 1, %s2
  %s5 = scalar_select 0, %s4, %s2
  $region1: #{_copy_small.1} parent=0
    #allocation2 [shape = 'u8[8192]{0}', space=vmem, size = 0x2000, scoped, tag = 'input window, operand 0, single buffered']
    #allocation3 [shape = 's32[1]{0}', space=sflag, size = 0x4, scoped, tag = 'scoped memory for _copy_small.1']
    #allocation4 [shape = 's32[1]{0}', space=sflag, size = 0x4, scoped, tag = 'scoped memory for _copy_small.1']
    #allocation5 [shape = 'u8[8192]{0}', space=vmem, size = 0x2000, scoped, tag = 'output window, operand 0, single buffered']
    %6 = vsyncpa [#allocation3], 0
    %7 = vsyncpa [#allocation4], 0
    // Predicated region
    $region2: #{_copy_small.1} parent=1 // pred_check
      _
    $region3: #{_copy_small.1} parent=1 // pred_check_branch
      %9 = sbr.rel (0) target = $region5
    $region4: #{_copy_small.1} parent=1 // pred_region
      %s11 = ssub.s32 256, 256
      %12 = vsyncadd [#allocation3], %s11
      %s13 = sshll.u32 [#allocation2], 4
      %s14 = int_to_ptr.vmem [resolvable:$true] %s13
      %19 = dma.hbm_to_vmem [thread:$0]  %s0, 256, %s14, [#allocation3], 128, 128, 8
    $region5: #{_copy_small.1} parent=1 // pred_fallthru
      _
    // Predicated region
    $region6: #{_copy_small.1} parent=1 // pred_check
      _
    $region7: #{_copy_small.1} parent=1 // pred_check_branch
      %21 = sbr.rel (0) target = $region9
    $region8: #{_copy_small.1} parent=1 // pred_region
      %22 = dma.done [#allocation3], 256
    $region9: #{_copy_small.1} parent=1 // pred_fallthru
      _
    %v23 = vld [vmem:[#allocation2] sm:$0xff]
    %v24 = vld [vmem:[#allocation2 + $0x8] sm:$0xff]
    %25 = vst [vmem:[#allocation5] sm:$0xff] %v23
    %26 = vst [vmem:[#allocation5 + $0x8] sm:$0xff] %v24
    // Predicated region
    $region10: #{_copy_small.1} parent=1 // pred_check
      _
    $region11: #{_copy_small.1} parent=1 // pred_check_branch
      %28 = sbr.rel (0) target = $region13
    $region12: #{_copy_small.1} parent=1 // pred_region
      %s30 = ssub.s32 256, 256
      %31 = vsyncadd [#allocation4], %s30
      %s32 = sshll.u32 [#allocation5], 4
      %s33 = int_to_ptr.vmem [resolvable:$true] %s32
      %38 = dma.vmem_to_hbm [thread:$0]  %s33, 256, %s1, [#allocation4], 128, 128, 8
    $region13: #{_copy_small.1} parent=1 // pred_fallthru
      _
    // Predicated region
    $region14: #{_copy_small.1} parent=1 // pred_check
      _
    $region15: #{_copy_small.1} parent=1 // pred_check_branch
      %40 = sbr.rel (0) target = $region17
    $region16: #{_copy_small.1} parent=1 // pred_region
      %41 = dma.done [#allocation4], 256
    $region17: #{_copy_small.1} parent=1 // pred_fallthru
      _
    %42 = vsyncpa [#allocation3], 1
    %43 = vsyncpa [#allocation4], 1

</llo_original>
